<compile_context>
chip_gen: v6e
topology: v6e:2x2x1
jax: 0.10.0
libtpu: 0.0.40
codegen_flags: <defaults>
</compile_context>

<pallas_src>
import math
import numpy as np
import jax
import jax.numpy as jnp
from jax.experimental import pallas as pl
from jax.experimental.pallas import tpu as pltpu


# ---------------------------------------------------------------------------
# Hash-grid encoding (tcnn "HashGrid", Smoothstep interpolation) -- plain JAX.
# TODO(synk): the data-dependent hash-table gather has no clean Pallas
#             equivalent; it stays in XLA and feeds the Pallas MLP kernel.
# ---------------------------------------------------------------------------
def hash_grid_encode(points, tables, *, num_levels, level_dim, per_level_scale,
                     base_resolution=16, log2_hashmap_size=14):
    T = 1 << log2_hashmap_size
    primes = jnp.array([1, 2654435761, 805459861], dtype=jnp.uint32)
    feats = []
    for lvl in range(num_levels):
        grid_scale = base_resolution * (per_level_scale ** lvl) - 1.0
        pos = points * grid_scale + 0.5
        pos_floor = jnp.floor(pos)
        frac = pos - pos_floor                       # (N, 3)
        base_idx = pos_floor.astype(jnp.uint32)      # (N, 3)
        # Smoothstep interpolation weights
        w = frac * frac * (3.0 - 2.0 * frac)         # (N, 3)
        level_feat = jnp.zeros((points.shape[0], level_dim), dtype=jnp.float32)
        for c in range(8):
            offs = jnp.array([(c >> 0) & 1, (c >> 1) & 1, (c >> 2) & 1],
                             dtype=jnp.uint32)
            corner = base_idx + offs[None, :]
            hashed = (corner * primes[None, :])
            idx = (hashed[:, 0] ^ hashed[:, 1] ^ hashed[:, 2]) & jnp.uint32(T - 1)
            f = jnp.take(tables[lvl], idx.astype(jnp.int32), axis=0)   # (N, level_dim)
            wc = jnp.prod(jnp.where(offs[None, :] == 1, w, 1.0 - w),
                          axis=-1, keepdims=True)
            level_feat = level_feat + wc * f
        feats.append(level_feat)
    return jnp.concatenate(feats, axis=-1)           # (N, F)


# ---------------------------------------------------------------------------
# Softplus(beta=100), branch-free stable form:
#   softplus(z)/100 = (max(z, 0) + log1p(exp(-|z|))) / 100 ,  z = 100*x
# Matches PyTorch Softplus(beta=100) (linear regime included) to f32 precision.
# ---------------------------------------------------------------------------
def _softplus100(x):
    z = 100.0 * x
    return (jnp.maximum(z, 0.0) + jnp.log1p(jnp.exp(-jnp.abs(z)))) * 0.01


# ---------------------------------------------------------------------------
# Pallas kernel: 3-layer MLP in transposed (feature-major, row-tile-in-lanes)
# layout. All matmul operands may be bf16; accumulation/activations are f32.
# ---------------------------------------------------------------------------
def volume_sdf_mlp_kernel(pts_ref, h_ref,
                          w1p_ref, w1h_ref, b1_ref,
                          w2_ref, b2_ref,
                          w3_ref, b3_ref,
                          out_ref):
    # pts_ref: (3, TN) f32   raw points (affine already folded into w1p/b1)
    # h_ref  : (F, TN)       hash features (level_mask already folded into w1h)
    # Layer 1: hash term on the MXU (K = F), K=3 point term as VPU outer products.
    x = jnp.dot(w1h_ref[...], h_ref[...],
                preferred_element_type=jnp.float32)              # (64, TN) f32
    p = pts_ref[...]                                             # (3, TN)  f32
    x = (x + b1_ref[...]
         + w1p_ref[:, 0:1] * p[0:1, :]
         + w1p_ref[:, 1:2] * p[1:2, :]
         + w1p_ref[:, 2:3] * p[2:3, :])
    x = _softplus100(x)

    # Layer 2 (64x64).
    x = jnp.dot(w2_ref[...], x.astype(w2_ref.dtype),
                preferred_element_type=jnp.float32) + b2_ref[...]
    x = _softplus100(x)

    # Output layer (13x64). Output is (13, TN): lane-dense store.
    x = jnp.dot(w3_ref[...], x.astype(w3_ref.dtype),
                preferred_element_type=jnp.float32) + b3_ref[...]
    out_ref[...] = x.astype(out_ref.dtype)


def volume_sdf_forward(points, enc_tables, level_mask, params, *,
                       num_levels, level_dim, per_level_scale,
                       tile_n=2048, use_bf16=True):
    assert tile_n % 128 == 0
    N = points.shape[0]
    F = num_levels * level_dim

    # Hash-grid encoding (plain-JAX glue); cast to the matmul dtype right away
    # so only bf16 (half the HBM traffic) round-trips when use_bf16 is set.
    h = hash_grid_encode(points, enc_tables,
                         num_levels=num_levels, level_dim=level_dim,
                         per_level_scale=per_level_scale)

    cdt = jnp.bfloat16 if use_bf16 else jnp.float32
    w1p, w1h, b1, w2, b2, w3, b3 = params
    n_out = w3.shape[1]

    # Fold level_mask into the first-layer hash weights:  (h*m) @ W == h @ (diag(m) W)
    w1h_t = (w1h * level_mask.reshape(F, 1)).T.astype(cdt)            # (64, F)
    # Fold the "2*p - 1" affine into the point weights / bias:
    #   (2p-1) @ W1p + b1  ==  p @ (2*W1p) + (b1 - sum_rows(W1p))
    w1p_t = (2.0 * w1p).T.astype(jnp.float32)                         # (64, 3)  VPU path, f32
    b1_t = (b1 - jnp.sum(w1p, axis=0, keepdims=True)).T.astype(jnp.float32)   # (64, 1)
    w2_t = w2.T.astype(cdt)                                           # (64, 64)
    b2_t = b2.T.astype(jnp.float32)                                   # (64, 1)
    w3_t = w3.T.astype(cdt)                                           # (13, 64)
    b3_t = b3.T.astype(jnp.float32)                                   # (13, 1)

    # Row tile: multiple of 128, clamped for small N, ragged tail zero-padded.
    tn = min(tile_n, 128 * pl.cdiv(N, 128))
    n_pad = tn * pl.cdiv(N, tn)
    pad = n_pad - N
    # Transposed, lane-dense layout: the (padded) row dim is the lane dim.
    pts_t = jnp.pad(points, ((0, pad), (0, 0))).T                     # (3, n_pad) f32
    h_t = jnp.pad(h.astype(cdt), ((0, pad), (0, 0))).T                # (F, n_pad) bf16/f32

    grid = (n_pad // tn,)
    out_t = pl.pallas_call(
        volume_sdf_mlp_kernel,
        out_shape=jax.ShapeDtypeStruct((n_out, n_pad), jnp.float32),
        grid=grid,
        in_specs=[
            pl.BlockSpec((3, tn), lambda i: (0, i)),
            pl.BlockSpec((F, tn), lambda i: (0, i)),
            pl.BlockSpec(w1p_t.shape, lambda i: (0, 0)),
            pl.BlockSpec(w1h_t.shape, lambda i: (0, 0)),
            pl.BlockSpec(b1_t.shape, lambda i: (0, 0)),
            pl.BlockSpec(w2_t.shape, lambda i: (0, 0)),
            pl.BlockSpec(b2_t.shape, lambda i: (0, 0)),
            pl.BlockSpec(w3_t.shape, lambda i: (0, 0)),
            pl.BlockSpec(b3_t.shape, lambda i: (0, 0)),
        ],
        out_specs=pl.BlockSpec((n_out, tn), lambda i: (0, i)),
        # Row tiles are independent (no accumulator) -> megacore sharding on v7x.
        compiler_params=pltpu.CompilerParams(dimension_semantics=("parallel",)),
    )(pts_t, h_t, w1p_t, w1h_t, b1_t, w2_t, b2_t, w3_t, b3_t)

    out = out_t.T[:N]                                                 # (N, n_out) f32
    sdf, feature = out[..., :1], out
    return sdf, feature


# ---------------------------------------------------------------------------
# Deterministic parameter construction (mirrors VanillaMLP sphere_init +
# weight_norm; at init weight_norm(W) == W, computed explicitly anyway).
# ---------------------------------------------------------------------------
def make_params(key, dim_in, n_neurons=64, n_out=13, sphere_init_radius=0.5):
    k1, k2, k3 = jax.random.split(key, 3)
    # First layer (torch weight shape (n_neurons, dim_in)); store transposed.
    w1_v = jnp.zeros((n_neurons, dim_in), jnp.float32)
    w1_v = w1_v.at[:, :3].set(
        jax.random.normal(k1, (n_neurons, 3)) * (math.sqrt(2.0) / math.sqrt(n_neurons)))
    b1 = jnp.zeros((1, n_neurons), jnp.float32)
    # Hidden layer
    w2_v = jax.random.normal(k2, (n_neurons, n_neurons)) * (math.sqrt(2.0) / math.sqrt(n_neurons))
    b2 = jnp.zeros((1, n_neurons), jnp.float32)
    # Last layer
    w3_v = (math.sqrt(math.pi) / math.sqrt(n_neurons)
            + 1e-4 * jax.random.normal(k3, (n_out, n_neurons)))
    b3 = jnp.full((1, n_out), -sphere_init_radius, jnp.float32)

    def weight_norm_identity(v):
        n = jnp.linalg.norm(v, axis=1, keepdims=True)
        return (n / jnp.maximum(n, 1e-12)) * v

    w1 = weight_norm_identity(w1_v).T.astype(jnp.float32)   # (dim_in, 64)
    w2 = weight_norm_identity(w2_v).T.astype(jnp.float32)   # (64, 64)
    w3 = weight_norm_identity(w3_v).T.astype(jnp.float32)   # (64, 13)
    w1p, w1h = w1[:3, :], w1[3:, :]
    return (w1p, w1h, b1, w2, b2, w3, b3)


def reference_forward(points, enc_tables, level_mask, params, *,
                      num_levels, level_dim, per_level_scale, use_bf16=True):
    cdt = jnp.bfloat16 if use_bf16 else jnp.float32
    h = hash_grid_encode(points, enc_tables, num_levels=num_levels,
                         level_dim=level_dim, per_level_scale=per_level_scale)
    w1p, w1h, b1, w2, b2, w3, b3 = params
    w1h_m = (w1h * level_mask.reshape(-1, 1)).astype(cdt)
    p = 2.0 * points - 1.0
    x = (jnp.dot(p, w1p, preferred_element_type=jnp.float32)
         + jnp.dot(h.astype(cdt), w1h_m, preferred_element_type=jnp.float32)
         + b1)
    x = _softplus100(x)
    x = jnp.dot(x.astype(cdt), w2.astype(cdt),
                preferred_element_type=jnp.float32) + b2
    x = _softplus100(x)
    out = jnp.dot(x.astype(cdt), w3.astype(cdt),
                  preferred_element_type=jnp.float32) + b3
    return out[..., :1], out


if __name__ == "__main__":
    # Small, module-consistent shapes
    num_levels, level_dim = 8, 2
    per_level_scale = 1.32
    n_output_dims = 13
    log2_hashmap_size = 14
    N = 200                      # deliberately NOT a multiple of 128 -> exercises padding
    F = num_levels * level_dim
    dim_in = F + 3

    key = jax.random.PRNGKey(0)
    kp, kt, kw = jax.random.split(key, 3)

    points = jax.random.uniform(kp, (N, 3), jnp.float32)            # in [0, 1]
    enc_tables = jax.random.uniform(
        kt, (num_levels, 1 << log2_hashmap_size, level_dim),
        jnp.float32, minval=-1e-4, maxval=1e-4)
    # Progressive level masking: first 6 levels active (exercises the mask fold).
    level_mask = jnp.repeat(
        jnp.array([1.0] * 6 + [0.0] * 2, jnp.float32), level_dim)[None, :]   # (1, F)
    params = make_params(kw, dim_in, n_neurons=64, n_out=n_output_dims)

    common = dict(num_levels=num_levels, level_dim=level_dim,
                  per_level_scale=per_level_scale)

    # bf16 matmul operands (v6e/v7x MXU-native), f32 accumulation/activations.
    sdf, feature = volume_sdf_forward(points, enc_tables, level_mask, params,
                                      use_bf16=True, **common)
    jax.block_until_ready((sdf, feature))
    sdf_ref, feat_ref = reference_forward(points, enc_tables, level_mask, params,
                                          use_bf16=True, **common)
    np.testing.assert_allclose(np.asarray(feature), np.asarray(feat_ref),
                               rtol=1e-3, atol=1e-3)
    np.testing.assert_allclose(np.asarray(sdf), np.asarray(sdf_ref),
                               rtol=1e-3, atol=1e-3)

    # Pure-f32 path, tight tolerance.
    sdf32, feat32 = volume_sdf_forward(points, enc_tables, level_mask, params,
                                       use_bf16=False, **common)
    jax.block_until_ready((sdf32, feat32))
    sdf32_ref, feat32_ref = reference_forward(points, enc_tables, level_mask, params,
                                              use_bf16=False, **common)
    np.testing.assert_allclose(np.asarray(feat32), np.asarray(feat32_ref),
                               rtol=2e-5, atol=2e-5)
    np.testing.assert_allclose(np.asarray(sdf32), np.asarray(sdf32_ref),
                               rtol=2e-5, atol=2e-5)

    assert sdf.shape == (N, 1) and feature.shape == (N, n_output_dims)
    print("KERNEL_OK")
</pallas_src>

<mosaic_0001>
module attributes {stable_mosaic.version = 11 : i64} {
  func.func @volume_sdf_mlp_kernel(%arg0: i32, %arg1: memref<3x256xf32, #tpu.memory_space<vmem>>, %arg2: memref<16x256xbf16, #tpu.memory_space<vmem>>, %arg3: memref<64x3xf32, #tpu.memory_space<vmem>>, %arg4: memref<64x16xbf16, #tpu.memory_space<vmem>>, %arg5: memref<64x1xf32, #tpu.memory_space<vmem>>, %arg6: memref<64x64xbf16, #tpu.memory_space<vmem>>, %arg7: memref<64x1xf32, #tpu.memory_space<vmem>>, %arg8: memref<13x64xbf16, #tpu.memory_space<vmem>>, %arg9: memref<13x1xf32, #tpu.memory_space<vmem>>, %arg10: memref<13x256xf32, #tpu.memory_space<vmem>>) attributes {dimension_semantics = [#tpu.dimension_semantics<parallel>], iteration_bounds = array<i64: 1>, scalar_prefetch = 0 : i64, scratch_operands = 0 : i64, tpu.core_type = #tpu.core_type<tc>, window_params = [{transform_indices = @transform_0, window_bounds = array<i64: 3, 256>}, {transform_indices = @transform_1, window_bounds = array<i64: 16, 256>}, {pipeline_mode = #tpu.pipeline_mode<synchronous>, transform_indices = @transform_2, window_bounds = array<i64: 64, 3>}, {pipeline_mode = #tpu.pipeline_mode<synchronous>, transform_indices = @transform_3, window_bounds = array<i64: 64, 16>}, {pipeline_mode = #tpu.pipeline_mode<synchronous>, transform_indices = @transform_4, window_bounds = array<i64: 64, 1>}, {pipeline_mode = #tpu.pipeline_mode<synchronous>, transform_indices = @transform_5, window_bounds = array<i64: 64, 64>}, {pipeline_mode = #tpu.pipeline_mode<synchronous>, transform_indices = @transform_6, window_bounds = array<i64: 64, 1>}, {pipeline_mode = #tpu.pipeline_mode<synchronous>, transform_indices = @transform_7, window_bounds = array<i64: 13, 64>}, {pipeline_mode = #tpu.pipeline_mode<synchronous>, transform_indices = @transform_8, window_bounds = array<i64: 13, 1>}, {transform_indices = @transform_9, window_bounds = array<i64: 13, 256>}]} {
    %c0 = arith.constant 0 : index
    %c0_0 = arith.constant 0 : index
    %0 = vector.load %arg4[%c0, %c0_0] : memref<64x16xbf16, #tpu.memory_space<vmem>>, vector<64x16xbf16>
    %c0_1 = arith.constant 0 : index
    %c0_2 = arith.constant 0 : index
    %1 = vector.load %arg2[%c0_1, %c0_2] : memref<16x256xbf16, #tpu.memory_space<vmem>>, vector<16x256xbf16>
    %cst = arith.constant dense<0.000000e+00> : vector<64x256xf32>
    %2 = tpu.matmul %0, %1, %cst {dimension_numbers = #tpu.dot_dimension_numbers<[1], [0], [0], [1], [0, 0, 1, 1], [], []>} : vector<64x16xbf16>, vector<16x256xbf16>, vector<64x256xf32> -> vector<64x256xf32>
    %c0_3 = arith.constant 0 : index
    %c0_4 = arith.constant 0 : index
    %3 = vector.load %arg1[%c0_3, %c0_4] : memref<3x256xf32, #tpu.memory_space<vmem>>, vector<3x256xf32>
    %c0_5 = arith.constant 0 : index
    %c0_6 = arith.constant 0 : index
    %4 = vector.load %arg5[%c0_5, %c0_6] : memref<64x1xf32, #tpu.memory_space<vmem>>, vector<64x1xf32>
    %5 = vector.broadcast %4 : vector<64x1xf32> to vector<64x256xf32>
    %6 = arith.addf %2, %5 : vector<64x256xf32>
    %c0_7 = arith.constant 0 : index
    %c0_8 = arith.constant 0 : index
    %7 = vector.load %arg3[%c0_7, %c0_8] : memref<64x3xf32, #tpu.memory_space<vmem>>, vector<64x1xf32>
    %8 = vector.extract_strided_slice %3 {offsets = [0, 0], sizes = [1, 256], strides = [1, 1]} : vector<3x256xf32> to vector<1x256xf32>
    %9 = vector.broadcast %7 : vector<64x1xf32> to vector<64x256xf32>
    %10 = vector.broadcast %8 : vector<1x256xf32> to vector<64x256xf32>
    %11 = arith.mulf %9, %10 : vector<64x256xf32>
    %12 = arith.addf %6, %11 : vector<64x256xf32>
    %c0_9 = arith.constant 0 : index
    %c1 = arith.constant 1 : index
    %13 = vector.load %arg3[%c0_9, %c1] : memref<64x3xf32, #tpu.memory_space<vmem>>, vector<64x1xf32>
    %14 = vector.extract_strided_slice %3 {offsets = [1, 0], sizes = [1, 256], strides = [1, 1]} : vector<3x256xf32> to vector<1x256xf32>
    %15 = vector.broadcast %13 : vector<64x1xf32> to vector<64x256xf32>
    %16 = vector.broadcast %14 : vector<1x256xf32> to vector<64x256xf32>
    %17 = arith.mulf %15, %16 : vector<64x256xf32>
    %18 = arith.addf %12, %17 : vector<64x256xf32>
    %c0_10 = arith.constant 0 : index
    %c2 = arith.constant 2 : index
    %19 = vector.load %arg3[%c0_10, %c2] : memref<64x3xf32, #tpu.memory_space<vmem>>, vector<64x1xf32>
    %20 = vector.extract_strided_slice %3 {offsets = [2, 0], sizes = [1, 256], strides = [1, 1]} : vector<3x256xf32> to vector<1x256xf32>
    %21 = vector.broadcast %19 : vector<64x1xf32> to vector<64x256xf32>
    %22 = vector.broadcast %20 : vector<1x256xf32> to vector<64x256xf32>
    %23 = arith.mulf %21, %22 : vector<64x256xf32>
    %24 = arith.addf %18, %23 : vector<64x256xf32>
    %cst_11 = arith.constant 1.000000e+02 : f32
    %25 = vector.broadcast %cst_11 : f32 to vector<64x256xf32>
    %26 = arith.mulf %25, %24 : vector<64x256xf32>
    %cst_12 = arith.constant 0.000000e+00 : f32
    %27 = vector.broadcast %cst_12 : f32 to vector<64x256xf32>
    %28 = arith.maximumf %26, %27 : vector<64x256xf32>
    %29 = math.absf %26 : vector<64x256xf32>
    %cst_13 = arith.constant 0.000000e+00 : f32
    %30 = vector.broadcast %cst_13 : f32 to vector<64x256xf32>
    %31 = arith.subf %30, %29 : vector<64x256xf32>
    %32 = math.exp %31 : vector<64x256xf32>
    %33 = math.log1p %32 : vector<64x256xf32>
    %34 = arith.addf %28, %33 : vector<64x256xf32>
    %cst_14 = arith.constant 0.00999999977 : f32
    %35 = vector.broadcast %cst_14 : f32 to vector<64x256xf32>
    %36 = arith.mulf %34, %35 : vector<64x256xf32>
    %c0_15 = arith.constant 0 : index
    %c0_16 = arith.constant 0 : index
    %37 = vector.load %arg6[%c0_15, %c0_16] : memref<64x64xbf16, #tpu.memory_space<vmem>>, vector<64x64xbf16>
    %38 = arith.truncf %36 : vector<64x256xf32> to vector<64x256xbf16>
    %cst_17 = arith.constant dense<0.000000e+00> : vector<64x256xf32>
    %39 = tpu.matmul %37, %38, %cst_17 {dimension_numbers = #tpu.dot_dimension_numbers<[1], [0], [0], [1], [0, 0, 1, 1], [], []>} : vector<64x64xbf16>, vector<64x256xbf16>, vector<64x256xf32> -> vector<64x256xf32>
    %c0_18 = arith.constant 0 : index
    %c0_19 = arith.constant 0 : index
    %40 = vector.load %arg7[%c0_18, %c0_19] : memref<64x1xf32, #tpu.memory_space<vmem>>, vector<64x1xf32>
    %41 = vector.broadcast %40 : vector<64x1xf32> to vector<64x256xf32>
    %42 = arith.addf %39, %41 : vector<64x256xf32>
    %cst_20 = arith.constant 1.000000e+02 : f32
    %43 = vector.broadcast %cst_20 : f32 to vector<64x256xf32>
    %44 = arith.mulf %43, %42 : vector<64x256xf32>
    %cst_21 = arith.constant 0.000000e+00 : f32
    %45 = vector.broadcast %cst_21 : f32 to vector<64x256xf32>
    %46 = arith.maximumf %44, %45 : vector<64x256xf32>
    %47 = math.absf %44 : vector<64x256xf32>
    %cst_22 = arith.constant 0.000000e+00 : f32
    %48 = vector.broadcast %cst_22 : f32 to vector<64x256xf32>
    %49 = arith.subf %48, %47 : vector<64x256xf32>
    %50 = math.exp %49 : vector<64x256xf32>
    %51 = math.log1p %50 : vector<64x256xf32>
    %52 = arith.addf %46, %51 : vector<64x256xf32>
    %cst_23 = arith.constant 0.00999999977 : f32
    %53 = vector.broadcast %cst_23 : f32 to vector<64x256xf32>
    %54 = arith.mulf %52, %53 : vector<64x256xf32>
    %c0_24 = arith.constant 0 : index
    %c0_25 = arith.constant 0 : index
    %55 = vector.load %arg8[%c0_24, %c0_25] : memref<13x64xbf16, #tpu.memory_space<vmem>>, vector<13x64xbf16>
    %56 = arith.truncf %54 : vector<64x256xf32> to vector<64x256xbf16>
    %cst_26 = arith.constant dense<0.000000e+00> : vector<13x256xf32>
    %57 = tpu.matmul %55, %56, %cst_26 {dimension_numbers = #tpu.dot_dimension_numbers<[1], [0], [0], [1], [0, 0, 1, 1], [], []>} : vector<13x64xbf16>, vector<64x256xbf16>, vector<13x256xf32> -> vector<13x256xf32>
    %c0_27 = arith.constant 0 : index
    %c0_28 = arith.constant 0 : index
    %58 = vector.load %arg9[%c0_27, %c0_28] : memref<13x1xf32, #tpu.memory_space<vmem>>, vector<13x1xf32>
    %59 = vector.broadcast %58 : vector<13x1xf32> to vector<13x256xf32>
    %60 = arith.addf %57, %59 : vector<13x256xf32>
    %c0_29 = arith.constant 0 : index
    %c0_30 = arith.constant 0 : index
    %61 = vector.load %arg10[%c0_29, %c0_30] : memref<13x256xf32, #tpu.memory_space<vmem>>, vector<13x256xf32>
    tpu.vector_store %arg10[%c0_29, %c0_30], %60 {strides = array<i32>} : memref<13x256xf32, #tpu.memory_space<vmem>>, vector<13x256xf32>,
    return
  }
  func.func @transform_0(%arg0: i32) -> (i32, i32) {
    %c0_i32 = arith.constant 0 : i32
    %c0_i32_0 = arith.constant 0 : i32
    return %c0_i32, %arg0 : i32, i32
  }
  func.func @transform_1(%arg0: i32) -> (i32, i32) {
    %c0_i32 = arith.constant 0 : i32
    %c0_i32_0 = arith.constant 0 : i32
    return %c0_i32, %arg0 : i32, i32
  }
  func.func @transform_2(%arg0: i32) -> (i32, i32) {
    %c0_i32 = arith.constant 0 : i32
    %c0_i32_0 = arith.constant 0 : i32
    %c0_i32_1 = arith.constant 0 : i32
    return %c0_i32, %c0_i32_0 : i32, i32
  }
  func.func @transform_3(%arg0: i32) -> (i32, i32) {
    %c0_i32 = arith.constant 0 : i32
    %c0_i32_0 = arith.constant 0 : i32
    %c0_i32_1 = arith.constant 0 : i32
    return %c0_i32, %c0_i32_0 : i32, i32
  }
  func.func @transform_4(%arg0: i32) -> (i32, i32) {
    %c0_i32 = arith.constant 0 : i32
    %c0_i32_0 = arith.constant 0 : i32
    %c0_i32_1 = arith.constant 0 : i32
    return %c0_i32, %c0_i32_0 : i32, i32
  }
  func.func @transform_5(%arg0: i32) -> (i32, i32) {
    %c0_i32 = arith.constant 0 : i32
    %c0_i32_0 = arith.constant 0 : i32
    %c0_i32_1 = arith.constant 0 : i32
    return %c0_i32, %c0_i32_0 : i32, i32
  }
  func.func @transform_6(%arg0: i32) -> (i32, i32) {
    %c0_i32 = arith.constant 0 : i32
    %c0_i32_0 = arith.constant 0 : i32
    %c0_i32_1 = arith.constant 0 : i32
    return %c0_i32, %c0_i32_0 : i32, i32
  }
  func.func @transform_7(%arg0: i32) -> (i32, i32) {
    %c0_i32 = arith.constant 0 : i32
    %c0_i32_0 = arith.constant 0 : i32
    %c0_i32_1 = arith.constant 0 : i32
    return %c0_i32, %c0_i32_0 : i32, i32
  }
  func.func @transform_8(%arg0: i32) -> (i32, i32) {
    %c0_i32 = arith.constant 0 : i32
    %c0_i32_0 = arith.constant 0 : i32
    %c0_i32_1 = arith.constant 0 : i32
    return %c0_i32, %c0_i32_0 : i32, i32
  }
  func.func @transform_9(%arg0: i32) -> (i32, i32) {
    %c0_i32 = arith.constant 0 : i32
    %c0_i32_0 = arith.constant 0 : i32
    return %c0_i32, %arg0 : i32, i32
  }
}

</mosaic_0001>

<llo_original>
// kernel: tpu_custom_call.1
$region0: #{tpu_custom_call.1}
  #allocation0 [shape = 'u32[]', space=smem, size = 0x4, offset = 0x4, fixed_abs, tag = 'smem constant byte address 0x4 - core index']
  #allocation1 [shape = 'u32[144,128]{1,0:T(1,128)}', space=vmem, size = 0x12000, scoped, tag = 'internal scratch']
  %s0 = inlined_call_operand.vmem [shape: f32[3,256], index: 0, kind: input, shape index: {}]
  %s1 = inlined_call_operand.vmem [shape: bf16[16,256], index: 1, kind: input, shape index: {}]
  %s2 = inlined_call_operand.vmem [shape: f32[64,3], index: 2, kind: input, shape index: {}]
  %s3 = inlined_call_operand.vmem [shape: bf16[64,16], index: 3, kind: input, shape index: {}]
  %s4 = inlined_call_operand.vmem [shape: f32[64,1], index: 4, kind: input, shape index: {}]
  %s5 = inlined_call_operand.vmem [shape: bf16[64,64], index: 5, kind: input, shape index: {}]
  %s6 = inlined_call_operand.vmem [shape: f32[64,1], index: 6, kind: input, shape index: {}]
  %s7 = inlined_call_operand.vmem [shape: bf16[13,64], index: 7, kind: input, shape index: {}]
  %s8 = inlined_call_operand.vmem [shape: f32[13,1], index: 8, kind: input, shape index: {}]
  %s9 = inlined_call_operand.hbm [shape: f32[13,256], index: 9, kind: output, shape index: {}]
  %s10 = sld [smem:[#allocation0]]
  $region46: #{tpu_custom_call.1} parent=0
    _
  %s12 = ssub.s32 1, %s10
  %s13 = scalar_select 0, %s12, %s10
  $region1: #{tpu_custom_call.1} parent=0
    #allocation2 [shape = 'u8[16384]{0}', space=vmem, size = 0x4000, scoped, tag = 'output window, operand 0, single buffered']
    #allocation3 [shape = 's32[1]{0}', space=sflag, size = 0x4, scoped, tag = 'scoped memory for tpu_custom_call.1']
    %14 = vsyncpa [#allocation3], 0
    // Predicated region
    $region2: #{tpu_custom_call.1} parent=1 // pred_check
      _
    $region3: #{tpu_custom_call.1} parent=1 // pred_check_branch
      %16 = sbr.rel (0) target = $region5
    $region4: #{tpu_custom_call.1} parent=1 // pred_region
      _
    $region5: #{tpu_custom_call.1} parent=1 // pred_fallthru
      _
    // Predicated region
    $region6: #{tpu_custom_call.1} parent=1 // pred_check
      _
    $region7: #{tpu_custom_call.1} parent=1 // pred_check_branch
      %18 = sbr.rel (0) target = $region9
    $region8: #{tpu_custom_call.1} parent=1 // pred_region
      _
    $region9: #{tpu_custom_call.1} parent=1 // pred_fallthru
      _
    // Predicated region
    $region10: #{tpu_custom_call.1} parent=1 // pred_check
      _
    $region11: #{tpu_custom_call.1} parent=1 // pred_check_branch
      %20 = sbr.rel (0) target = $region13
    $region12: #{tpu_custom_call.1} parent=1 // pred_region
      _
    $region13: #{tpu_custom_call.1} parent=1 // pred_fallthru
      _
    // Predicated region
    $region14: #{tpu_custom_call.1} parent=1 // pred_check
      _
    $region15: #{tpu_custom_call.1} parent=1 // pred_check_branch
      %22 = sbr.rel (0) target = $region17
    $region16: #{tpu_custom_call.1} parent=1 // pred_region
      _
    $region17: #{tpu_custom_call.1} parent=1 // pred_fallthru
      _
    // Predicated region
    $region18: #{tpu_custom_call.1} parent=1 // pred_check
      _
    $region19: #{tpu_custom_call.1} parent=1 // pred_check_branch
      %24 = sbr.rel (0) target = $region21
    $region20: #{tpu_custom_call.1} parent=1 // pred_region
      _
    $region21: #{tpu_custom_call.1} parent=1 // pred_fallthru
      _
    // Predicated region
    $region22: #{tpu_custom_call.1} parent=1 // pred_check
      _
    $region23: #{tpu_custom_call.1} parent=1 // pred_check_branch
      %26 = sbr.rel (0) target = $region25
    $region24: #{tpu_custom_call.1} parent=1 // pred_region
      _
    $region25: #{tpu_custom_call.1} parent=1 // pred_fallthru
      _
    // Predicated region
    $region26: #{tpu_custom_call.1} parent=1 // pred_check
      _
    $region27: #{tpu_custom_call.1} parent=1 // pred_check_branch
      %28 = sbr.rel (0) target = $region29
    $region28: #{tpu_custom_call.1} parent=1 // pred_region
      _
    $region29: #{tpu_custom_call.1} parent=1 // pred_fallthru
      _
    // Predicated region
    $region30: #{tpu_custom_call.1} parent=1 // pred_check
      _
    $region31: #{tpu_custom_call.1} parent=1 // pred_check_branch
      %30 = sbr.rel (0) target = $region33
    $region32: #{tpu_custom_call.1} parent=1 // pred_region
      _
    $region33: #{tpu_custom_call.1} parent=1 // pred_fallthru
      _
    // Predicated region
    $region34: #{tpu_custom_call.1} parent=1 // pred_check
      _
    $region35: #{tpu_custom_call.1} parent=1 // pred_check_branch
      %32 = sbr.rel (0) target = $region37
    $region36: #{tpu_custom_call.1} parent=1 // pred_region
      _
    $region37: #{tpu_custom_call.1} parent=1 // pred_fallthru
      _
    %v34 = vld [vmem:[%s3] sm:$0xf]
    %v35 = vld [vmem:[%s3 + $0x4] sm:$0xf]
    %v36 = vld [vmem:[%s3 + $0x8] sm:$0xf]
    %v37 = vld [vmem:[%s3 + $0xc] sm:$0xf]
    %v38 = vld [vmem:[%s3 + $0x10] sm:$0xf]
    %v39 = vld [vmem:[%s3 + $0x14] sm:$0xf]
    %v40 = vld [vmem:[%s3 + $0x18] sm:$0xf]
    %v41 = vld [vmem:[%s3 + $0x1c] sm:$0xf]
    %v42 = vld [vmem:[%s1] sm:$0xff]
    %v43 = vld [vmem:[%s1 + $0x8] sm:$0xff]
    %v44 = vld [vmem:[%s0] sm:$0x77]
    %v45 = vld [vmem:[%s4] sm:$0xff]
    %v46 = vld [vmem:[%s4 + $0x8] sm:$0xff]
    %v47 = vld [vmem:[%s4 + $0x10] sm:$0xff]
    %v48 = vld [vmem:[%s4 + $0x18] sm:$0xff]
    %v49 = vld [vmem:[%s4 + $0x20] sm:$0xff]
    %v50 = vld [vmem:[%s4 + $0x28] sm:$0xff]
    %v51 = vld [vmem:[%s4 + $0x30] sm:$0xff]
    %v52 = vld [vmem:[%s4 + $0x38] sm:$0xff]
    %54 = vset.pattern.permute.xlu0 0
    %55 = vperm.xlu0 %54, %v45
    %v56 = vpop.permute.xlu0 %55
    %59 = vset.pattern.permute.xlu0 0
    %60 = vperm.xlu0 %59, %v46
    %v61 = vpop.permute.xlu0 %60
    %64 = vset.pattern.permute.xlu0 0
    %65 = vperm.xlu0 %64, %v47
    %v66 = vpop.permute.xlu0 %65
    %69 = vset.pattern.permute.xlu0 0
    %70 = vperm.xlu0 %69, %v48
    %v71 = vpop.permute.xlu0 %70
    %74 = vset.pattern.permute.xlu0 0
    %75 = vperm.xlu0 %74, %v49
    %v76 = vpop.permute.xlu0 %75
    %79 = vset.pattern.permute.xlu0 0
    %80 = vperm.xlu0 %79, %v50
    %v81 = vpop.permute.xlu0 %80
    %84 = vset.pattern.permute.xlu0 0
    %85 = vperm.xlu0 %84, %v51
    %v86 = vpop.permute.xlu0 %85
    %89 = vset.pattern.permute.xlu0 0
    %90 = vperm.xlu0 %89, %v52
    %v91 = vpop.permute.xlu0 %90
    %v101 = vunpack.c.l.b16 %v34
    %v102 = vunpack.c.l.b16 %v35
    %v103 = vunpack.c.l.b16 %v36
    %v104 = vunpack.c.l.b16 %v37
    %v105 = vunpack.c.l.b16 %v38
    %v106 = vunpack.c.l.b16 %v39
    %v107 = vunpack.c.l.b16 %v40
    %v108 = vunpack.c.l.b16 %v41
    %v109 = vpack.c.b16 %v102, %v101
    %v110 = vpack.c.b16 %v104, %v103
    %v111 = vpack.c.b16 %v106, %v105
    %v112 = vpack.c.b16 %v108, %v107
    %v115 = vunpack.c.l.b16 %v42
    %v116 = vunpack.c.h.b16 %v42
    %v117 = vunpack.c.l.b16 %v43
    %v118 = vunpack.c.h.b16 %v43
    %v119 = vpack.c.b16 %v117, %v115
    %v120 = vpack.c.b16 %v118, %v116
    %vm123 = vcmask 130048
    %v125 = vsel %vm123, %v109, 0
    %v128 = vsel %vm123, %v110, 0
    %v131 = vsel %vm123, %v111, 0
    %v134 = vsel %vm123, %v112, 0
    %136 = vmatprep.subr.bf16.mxu0 0
    %137 = vmatpush1.bf16.msra.mxu0 0
    %138 = vmatprep.subr.bf16.mxu0 0
    %139 = vmatpush1.bf16.msra.mxu0 0
    %140 = vmatprep.subr.bf16.mxu0 0
    %141 = vmatpush1.bf16.msra.mxu0 0
    %142 = vmatprep.subr.bf16.mxu0 0
    %143 = vmatpush1.bf16.msra.mxu0 0
    %144 = vmatprep.subr.bf16.mxu0 0
    %145 = vmatpush1.bf16.msra.mxu0 0
    %146 = vmatprep.subr.bf16.mxu0 0
    %147 = vmatpush1.bf16.msra.mxu0 0
    %148 = vmatprep.subr.bf16.mxu0 0
    %149 = vmatpush1.bf16.msra.mxu0 0
    %150 = vmatprep.subr.bf16.mxu0 %v120
    %151 = vmatpush1.bf16.msra.mxu0 %v119
    %152 = vmatprep.subr.bf16.mxu0 0
    %153 = vmatpush2.bf16.msra.mxu0 0
    %154 = vmatprep.subr.bf16.mxu0 0
    %155 = vmatpush2.bf16.msra.mxu0 0
    %156 = vmatprep.subr.bf16.mxu0 0
    %157 = vmatpush2.bf16.msra.mxu0 0
    %158 = vmatprep.subr.bf16.mxu0 0
    %159 = vmatpush2.bf16.msra.mxu0 0
    %160 = vmatprep.subr.bf16.mxu0 0
    %161 = vmatpush2.bf16.msra.mxu0 0
    %162 = vmatprep.subr.bf16.mxu0 0
    %163 = vmatpush2.bf16.msra.mxu0 0
    %164 = vmatprep.subr.bf16.mxu0 0
    %165 = vmatpush2.bf16.msra.mxu0 0
    %166 = vmatprep.subr.bf16.mxu0 0
    %167 = vmatpush2.bf16.msra.mxu0 0
    %168 = vmatprep.mubr.bf16.mxu0 0
    %169 = vmatmul.mubr.bf16.gmra.mxu0 %v125
    %v170 = vpop.f32.mrf.mxu0
    %v171 = vadd.f32 %v56, %v170
    %v172 = vpop.f32.mrf.mxu0
    %v173 = vadd.f32 %v56, %v172
    %v174 = vpop.f32.mrf.mxu0
    %v175 = vadd.f32 %v61, %v174
    %v176 = vpop.f32.mrf.mxu0
    %v177 = vadd.f32 %v61, %v176
    %178 = vmatprep.mubr.bf16.mxu0 0
    %179 = vmatmul.mubr.bf16.gmra.mxu0 %v128
    %v180 = vpop.f32.mrf.mxu0
    %v181 = vadd.f32 %v66, %v180
    %v182 = vpop.f32.mrf.mxu0
    %v183 = vadd.f32 %v66, %v182
    %v184 = vpop.f32.mrf.mxu0
    %v185 = vadd.f32 %v71, %v184
    %v186 = vpop.f32.mrf.mxu0
    %v187 = vadd.f32 %v71, %v186
    %188 = vmatprep.mubr.bf16.mxu0 0
    %189 = vmatmul.mubr.bf16.gmra.mxu0 %v131
    %v190 = vpop.f32.mrf.mxu0
    %v191 = vadd.f32 %v76, %v190
    %v192 = vpop.f32.mrf.mxu0
    %v193 = vadd.f32 %v76, %v192
    %v194 = vpop.f32.mrf.mxu0
    %v195 = vadd.f32 %v81, %v194
    %v196 = vpop.f32.mrf.mxu0
    %v197 = vadd.f32 %v81, %v196
    %198 = vmatprep.mubr.bf16.mxu0 0
    %199 = vmatmul.mubr.bf16.gmra.mxu0 %v134
    %v200 = vpop.f32.mrf.mxu0
    %v201 = vadd.f32 %v86, %v200
    %v202 = vpop.f32.mrf.mxu0
    %v203 = vadd.f32 %v86, %v202
    %v204 = vpop.f32.mrf.mxu0
    %v205 = vadd.f32 %v91, %v204
    %v206 = vpop.f32.mrf.mxu0
    %v207 = vadd.f32 %v91, %v206
    %208 = vdwg.mxu0
    %v209 = vld [vmem:[%s2] sm:$0xff]
    %v210 = vld [vmem:[%s2 + $0x8] sm:$0xff]
    %v211 = vld [vmem:[%s2 + $0x10] sm:$0xff]
    %v212 = vld [vmem:[%s2 + $0x18] sm:$0xff]
    %v213 = vld [vmem:[%s2 + $0x20] sm:$0xff]
    %v214 = vld [vmem:[%s2 + $0x28] sm:$0xff]
    %v215 = vld [vmem:[%s2 + $0x30] sm:$0xff]
    %v216 = vld [vmem:[%s2 + $0x38] sm:$0xff]
    %218 = vset.pattern.permute.xlu0 0
    %219 = vperm.xlu0 %218, %v209
    %v220 = vpop.permute.xlu0 %219
    %223 = vset.pattern.permute.xlu0 0
    %224 = vperm.xlu0 %223, %v210
    %v225 = vpop.permute.xlu0 %224
    %228 = vset.pattern.permute.xlu0 0
    %229 = vperm.xlu0 %228, %v211
    %v230 = vpop.permute.xlu0 %229
    %233 = vset.pattern.permute.xlu0 0
    %234 = vperm.xlu0 %233, %v212
    %v235 = vpop.permute.xlu0 %234
    %238 = vset.pattern.permute.xlu0 0
    %239 = vperm.xlu0 %238, %v213
    %v240 = vpop.permute.xlu0 %239
    %243 = vset.pattern.permute.xlu0 0
    %244 = vperm.xlu0 %243, %v214
    %v245 = vpop.permute.xlu0 %244
    %248 = vset.pattern.permute.xlu0 0
    %249 = vperm.xlu0 %248, %v215
    %v250 = vpop.permute.xlu0 %249
    %253 = vset.pattern.permute.xlu0 0
    %254 = vperm.xlu0 %253, %v216
    %v255 = vpop.permute.xlu0 %254
    %v258 = vlaneseq
    %v259 = vshrl.u32 %v258, 7
    %v260 = vsub.s32 0, %v259
    %v261 = vrot.slane %v44, %v260
    %v262 = vlaneseq
    %v263 = vshrl.u32 %v262, 7
    %v264 = vsub.s32 4, %v263
    %v265 = vrot.slane %v44, %v264
    %v268 = vlaneseq
    %v269 = vshrl.u32 %v268, 7
    %v270 = vsub.s32 0, %v269
    %v271 = vrot.slane %v261, %v270
    %v272 = vlaneseq
    %v273 = vshrl.u32 %v272, 7
    %v274 = vsub.s32 0, %v273
    %v275 = vrot.slane %v265, %v274
    %v276 = vmul.f32 %v220, %v271
    %v277 = vmul.f32 %v220, %v275
    %v278 = vmul.f32 %v225, %v271
    %v279 = vmul.f32 %v225, %v275
    %v280 = vmul.f32 %v230, %v271
    %v281 = vmul.f32 %v230, %v275
    %v282 = vmul.f32 %v235, %v271
    %v283 = vmul.f32 %v235, %v275
    %v284 = vmul.f32 %v240, %v271
    %v285 = vmul.f32 %v240, %v275
    %v286 = vmul.f32 %v245, %v271
    %v287 = vmul.f32 %v245, %v275
    %v288 = vmul.f32 %v250, %v271
    %v289 = vmul.f32 %v250, %v275
    %v290 = vmul.f32 %v255, %v271
    %v291 = vmul.f32 %v255, %v275
    %v292 = vadd.f32 %v171, %v276
    %v293 = vadd.f32 %v173, %v277
    %v294 = vadd.f32 %v175, %v278
    %v295 = vadd.f32 %v177, %v279
    %v296 = vadd.f32 %v181, %v280
    %v297 = vadd.f32 %v183, %v281
    %v298 = vadd.f32 %v185, %v282
    %v299 = vadd.f32 %v187, %v283
    %v300 = vadd.f32 %v191, %v284
    %v301 = vadd.f32 %v193, %v285
    %v302 = vadd.f32 %v195, %v286
    %v303 = vadd.f32 %v197, %v287
    %v304 = vadd.f32 %v201, %v288
    %v305 = vadd.f32 %v203, %v289
    %v306 = vadd.f32 %v205, %v290
    %v307 = vadd.f32 %v207, %v291
    %308 = vset.pattern.permute.xlu0 1
    %309 = vperm.xlu0 %308, %v209
    %v310 = vpop.permute.xlu0 %309
    %312 = vset.pattern.permute.xlu0 1
    %313 = vperm.xlu0 %312, %v210
    %v314 = vpop.permute.xlu0 %313
    %316 = vset.pattern.permute.xlu0 1
    %317 = vperm.xlu0 %316, %v211
    %v318 = vpop.permute.xlu0 %317
    %320 = vset.pattern.permute.xlu0 1
    %321 = vperm.xlu0 %320, %v212
    %v322 = vpop.permute.xlu0 %321
    %324 = vset.pattern.permute.xlu0 1
    %325 = vperm.xlu0 %324, %v213
    %v326 = vpop.permute.xlu0 %325
    %328 = vset.pattern.permute.xlu0 1
    %329 = vperm.xlu0 %328, %v214
    %v330 = vpop.permute.xlu0 %329
    %332 = vset.pattern.permute.xlu0 1
    %333 = vperm.xlu0 %332, %v215
    %v334 = vpop.permute.xlu0 %333
    %336 = vset.pattern.permute.xlu0 1
    %337 = vperm.xlu0 %336, %v216
    %v338 = vpop.permute.xlu0 %337
    %v340 = vlaneseq
    %v341 = vshrl.u32 %v340, 7
    %v342 = vsub.s32 1, %v341
    %v343 = vrot.slane %v44, %v342
    %v344 = vlaneseq
    %v345 = vshrl.u32 %v344, 7
    %v346 = vsub.s32 5, %v345
    %v347 = vrot.slane %v44, %v346
    %v350 = vlaneseq
    %v351 = vshrl.u32 %v350, 7
    %v352 = vsub.s32 1, %v351
    %v353 = vrot.slane %v343, %v352
    %v354 = vlaneseq
    %v355 = vshrl.u32 %v354, 7
    %v356 = vsub.s32 1, %v355
    %v357 = vrot.slane %v347, %v356
    %v358 = vmul.f32 %v310, %v353
    %v359 = vmul.f32 %v310, %v357
    %v360 = vmul.f32 %v314, %v353
    %v361 = vmul.f32 %v314, %v357
    %v362 = vmul.f32 %v318, %v353
    %v363 = vmul.f32 %v318, %v357
    %v364 = vmul.f32 %v322, %v353
    %v365 = vmul.f32 %v322, %v357
    %v366 = vmul.f32 %v326, %v353
    %v367 = vmul.f32 %v326, %v357
    %v368 = vmul.f32 %v330, %v353
    %v369 = vmul.f32 %v330, %v357
    %v370 = vmul.f32 %v334, %v353
    %v371 = vmul.f32 %v334, %v357
    %v372 = vmul.f32 %v338, %v353
    %v373 = vmul.f32 %v338, %v357
    %v374 = vadd.f32 %v292, %v358
    %v375 = vadd.f32 %v293, %v359
    %v376 = vadd.f32 %v294, %v360
    %v377 = vadd.f32 %v295, %v361
    %v378 = vadd.f32 %v296, %v362
    %v379 = vadd.f32 %v297, %v363
    %v380 = vadd.f32 %v298, %v364
    %v381 = vadd.f32 %v299, %v365
    %v382 = vadd.f32 %v300, %v366
    %v383 = vadd.f32 %v301, %v367
    %v384 = vadd.f32 %v302, %v368
    %v385 = vadd.f32 %v303, %v369
    %v386 = vadd.f32 %v304, %v370
    %v387 = vadd.f32 %v305, %v371
    %v388 = vadd.f32 %v306, %v372
    %v389 = vadd.f32 %v307, %v373
    %390 = vset.pattern.permute.xlu0 2
    %391 = vperm.xlu0 %390, %v209
    %v392 = vpop.permute.xlu0 %391
    %394 = vset.pattern.permute.xlu0 2
    %395 = vperm.xlu0 %394, %v210
    %v396 = vpop.permute.xlu0 %395
    %398 = vset.pattern.permute.xlu0 2
    %399 = vperm.xlu0 %398, %v211
    %v400 = vpop.permute.xlu0 %399
    %402 = vset.pattern.permute.xlu0 2
    %403 = vperm.xlu0 %402, %v212
    %v404 = vpop.permute.xlu0 %403
    %406 = vset.pattern.permute.xlu0 2
    %407 = vperm.xlu0 %406, %v213
    %v408 = vpop.permute.xlu0 %407
    %410 = vset.pattern.permute.xlu0 2
    %411 = vperm.xlu0 %410, %v214
    %v412 = vpop.permute.xlu0 %411
    %414 = vset.pattern.permute.xlu0 2
    %415 = vperm.xlu0 %414, %v215
    %v416 = vpop.permute.xlu0 %415
    %418 = vset.pattern.permute.xlu0 2
    %419 = vperm.xlu0 %418, %v216
    %v420 = vpop.permute.xlu0 %419
    %v422 = vlaneseq
    %v423 = vshrl.u32 %v422, 7
    %v424 = vsub.s32 2, %v423
    %v425 = vrot.slane %v44, %v424
    %v426 = vlaneseq
    %v427 = vshrl.u32 %v426, 7
    %v428 = vsub.s32 6, %v427
    %v429 = vrot.slane %v44, %v428
    %v432 = vlaneseq
    %v433 = vshrl.u32 %v432, 7
    %v434 = vsub.s32 2, %v433
    %v435 = vrot.slane %v425, %v434
    %v436 = vlaneseq
    %v437 = vshrl.u32 %v436, 7
    %v438 = vsub.s32 2, %v437
    %v439 = vrot.slane %v429, %v438
    %v440 = vmul.f32 %v392, %v435
    %v441 = vmul.f32 %v392, %v439
    %v442 = vmul.f32 %v396, %v435
    %v443 = vmul.f32 %v396, %v439
    %v444 = vmul.f32 %v400, %v435
    %v445 = vmul.f32 %v400, %v439
    %v446 = vmul.f32 %v404, %v435
    %v447 = vmul.f32 %v404, %v439
    %v448 = vmul.f32 %v408, %v435
    %v449 = vmul.f32 %v408, %v439
    %v450 = vmul.f32 %v412, %v435
    %v451 = vmul.f32 %v412, %v439
    %v452 = vmul.f32 %v416, %v435
    %v453 = vmul.f32 %v416, %v439
    %v454 = vmul.f32 %v420, %v435
    %v455 = vmul.f32 %v420, %v439
    %v456 = vadd.f32 %v374, %v440
    %v457 = vadd.f32 %v375, %v441
    %v458 = vadd.f32 %v376, %v442
    %v459 = vadd.f32 %v377, %v443
    %v460 = vadd.f32 %v378, %v444
    %v461 = vadd.f32 %v379, %v445
    %v462 = vadd.f32 %v380, %v446
    %v463 = vadd.f32 %v381, %v447
    %v464 = vadd.f32 %v382, %v448
    %v465 = vadd.f32 %v383, %v449
    %v466 = vadd.f32 %v384, %v450
    %v467 = vadd.f32 %v385, %v451
    %v468 = vadd.f32 %v386, %v452
    %v469 = vadd.f32 %v387, %v453
    %v470 = vadd.f32 %v388, %v454
    %v471 = vadd.f32 %v389, %v455
    %v472 = vmul.f32 %v456, 100.0
    %v473 = vmul.f32 %v457, 100.0
    %v474 = vmul.f32 %v458, 100.0
    %v475 = vmul.f32 %v459, 100.0
    %v476 = vmul.f32 %v460, 100.0
    %v477 = vmul.f32 %v461, 100.0
    %v478 = vmul.f32 %v462, 100.0
    %v479 = vmul.f32 %v463, 100.0
    %v480 = vmul.f32 %v464, 100.0
    %v481 = vmul.f32 %v465, 100.0
    %v482 = vmul.f32 %v466, 100.0
    %v483 = vmul.f32 %v467, 100.0
    %v484 = vmul.f32 %v468, 100.0
    %v485 = vmul.f32 %v469, 100.0
    %v486 = vmul.f32 %v470, 100.0
    %v487 = vmul.f32 %v471, 100.0
    %v488 = vmax.f32 %v472, 0.0
    %v489 = vmax.f32 %v473, 0.0
    %v490 = vmax.f32 %v474, 0.0
    %v491 = vmax.f32 %v475, 0.0
    %v492 = vmax.f32 %v476, 0.0
    %v493 = vmax.f32 %v477, 0.0
    %v494 = vmax.f32 %v478, 0.0
    %v495 = vmax.f32 %v479, 0.0
    %v496 = vmax.f32 %v480, 0.0
    %v497 = vmax.f32 %v481, 0.0
    %v498 = vmax.f32 %v482, 0.0
    %v499 = vmax.f32 %v483, 0.0
    %v500 = vmax.f32 %v484, 0.0
    %v501 = vmax.f32 %v485, 0.0
    %v502 = vmax.f32 %v486, 0.0
    %v503 = vmax.f32 %v487, 0.0
    %v504 = vand.u32 2147483647, %v472
    %v505 = vand.u32 2147483647, %v473
    %v506 = vand.u32 2147483647, %v474
    %v507 = vand.u32 2147483647, %v475
    %v508 = vand.u32 2147483647, %v476
    %v509 = vand.u32 2147483647, %v477
    %v510 = vand.u32 2147483647, %v478
    %v511 = vand.u32 2147483647, %v479
    %v512 = vand.u32 2147483647, %v480
    %v513 = vand.u32 2147483647, %v481
    %v514 = vand.u32 2147483647, %v482
    %v515 = vand.u32 2147483647, %v483
    %v516 = vand.u32 2147483647, %v484
    %v517 = vand.u32 2147483647, %v485
    %v518 = vand.u32 2147483647, %v486
    %v519 = vand.u32 2147483647, %v487
    %v520 = vsub.f32 0.0, %v504
    %v521 = vsub.f32 0.0, %v505
    %v522 = vsub.f32 0.0, %v506
    %v523 = vsub.f32 0.0, %v507
    %v524 = vsub.f32 0.0, %v508
    %v525 = vsub.f32 0.0, %v509
    %v526 = vsub.f32 0.0, %v510
    %v527 = vsub.f32 0.0, %v511
    %v528 = vsub.f32 0.0, %v512
    %v529 = vsub.f32 0.0, %v513
    %v530 = vsub.f32 0.0, %v514
    %v531 = vsub.f32 0.0, %v515
    %v532 = vsub.f32 0.0, %v516
    %v533 = vsub.f32 0.0, %v517
    %v534 = vsub.f32 0.0, %v518
    %v535 = vsub.f32 0.0, %v519
    %v536 = vmul.f32 %v520, 1.442695
    %v537 = vpow.pop %v536
    %v538 = vmul.f32 %v521, 1.442695
    %v539 = vpow.pop %v538
    %v540 = vmul.f32 %v522, 1.442695
    %v541 = vpow.pop %v540
    %v542 = vmul.f32 %v523, 1.442695
    %v543 = vpow.pop %v542
    %v544 = vmul.f32 %v524, 1.442695
    %v545 = vpow.pop %v544
    %v546 = vmul.f32 %v525, 1.442695
    %v547 = vpow.pop %v546
    %v548 = vmul.f32 %v526, 1.442695
    %v549 = vpow.pop %v548
    %v550 = vmul.f32 %v527, 1.442695
    %v551 = vpow.pop %v550
    %v552 = vmul.f32 %v528, 1.442695
    %v553 = vpow.pop %v552
    %v554 = vmul.f32 %v529, 1.442695
    %v555 = vpow.pop %v554
    %v556 = vmul.f32 %v530, 1.442695
    %v557 = vpow.pop %v556
    %v558 = vmul.f32 %v531, 1.442695
    %v559 = vpow.pop %v558
    %v560 = vmul.f32 %v532, 1.442695
    %v561 = vpow.pop %v560
    %v562 = vmul.f32 %v533, 1.442695
    %v563 = vpow.pop %v562
    %v564 = vmul.f32 %v534, 1.442695
    %v565 = vpow.pop %v564
    %v566 = vmul.f32 %v535, 1.442695
    %v567 = vpow.pop %v566
    %v568 = vadd.f32 %v537, 1.0
    %v569 = vlog2.pop %v568
    %v570 = vmul.f32 %v569, 0.6931472
    %v571 = vmul.f32 -0.5, %v537
    %v572 = vadd.f32 %v571, 1.0
    %v573 = vmul.f32 %v572, %v537
    %v574 = vand.u32 2147483647, %v537
    %vm575 = vcmp.lt.f32.partialorder %v574, 0.0004427343
    %v576 = vsel %vm575, %v573, %v570
    %v577 = vadd.f32 %v539, 1.0
    %v578 = vlog2.pop %v577
    %v579 = vmul.f32 %v578, 0.6931472
    %v580 = vmul.f32 -0.5, %v539
    %v581 = vadd.f32 %v580, 1.0
    %v582 = vmul.f32 %v581, %v539
    %v583 = vand.u32 2147483647, %v539
    %vm584 = vcmp.lt.f32.partialorder %v583, 0.0004427343
    %v585 = vsel %vm584, %v582, %v579
    %v586 = vadd.f32 %v541, 1.0
    %v587 = vlog2.pop %v586
    %v588 = vmul.f32 %v587, 0.6931472
    %v589 = vmul.f32 -0.5, %v541
    %v590 = vadd.f32 %v589, 1.0
    %v591 = vmul.f32 %v590, %v541
    %v592 = vand.u32 2147483647, %v541
    %vm593 = vcmp.lt.f32.partialorder %v592, 0.0004427343
    %v594 = vsel %vm593, %v591, %v588
    %v595 = vadd.f32 %v543, 1.0
    %v596 = vlog2.pop %v595
    %v597 = vmul.f32 %v596, 0.6931472
    %v598 = vmul.f32 -0.5, %v543
    %v599 = vadd.f32 %v598, 1.0
    %v600 = vmul.f32 %v599, %v543
    %v601 = vand.u32 2147483647, %v543
    %vm602 = vcmp.lt.f32.partialorder %v601, 0.0004427343
    %v603 = vsel %vm602, %v600, %v597
    %v604 = vadd.f32 %v545, 1.0
    %v605 = vlog2.pop %v604
    %v606 = vmul.f32 %v605, 0.6931472
    %v607 = vmul.f32 -0.5, %v545
    %v608 = vadd.f32 %v607, 1.0
    %v609 = vmul.f32 %v608, %v545
    %v610 = vand.u32 2147483647, %v545
    %vm611 = vcmp.lt.f32.partialorder %v610, 0.0004427343
    %v612 = vsel %vm611, %v609, %v606
    %v613 = vadd.f32 %v547, 1.0
    %v614 = vlog2.pop %v613
    %v615 = vmul.f32 %v614, 0.6931472
    %v616 = vmul.f32 -0.5, %v547
    %v617 = vadd.f32 %v616, 1.0
    %v618 = vmul.f32 %v617, %v547
    %v619 = vand.u32 2147483647, %v547
    %vm620 = vcmp.lt.f32.partialorder %v619, 0.0004427343
    %v621 = vsel %vm620, %v618, %v615
    %v622 = vadd.f32 %v549, 1.0
    %v623 = vlog2.pop %v622
    %v624 = vmul.f32 %v623, 0.6931472
    %v625 = vmul.f32 -0.5, %v549
    %v626 = vadd.f32 %v625, 1.0
    %v627 = vmul.f32 %v626, %v549
    %v628 = vand.u32 2147483647, %v549
    %vm629 = vcmp.lt.f32.partialorder %v628, 0.0004427343
    %v630 = vsel %vm629, %v627, %v624
    %v631 = vadd.f32 %v551, 1.0
    %v632 = vlog2.pop %v631
    %v633 = vmul.f32 %v632, 0.6931472
    %v634 = vmul.f32 -0.5, %v551
    %v635 = vadd.f32 %v634, 1.0
    %v636 = vmul.f32 %v635, %v551
    %v637 = vand.u32 2147483647, %v551
    %vm638 = vcmp.lt.f32.partialorder %v637, 0.0004427343
    %v639 = vsel %vm638, %v636, %v633
    %v640 = vadd.f32 %v553, 1.0
    %v641 = vlog2.pop %v640
    %v642 = vmul.f32 %v641, 0.6931472
    %v643 = vmul.f32 -0.5, %v553
    %v644 = vadd.f32 %v643, 1.0
    %v645 = vmul.f32 %v644, %v553
    %v646 = vand.u32 2147483647, %v553
    %vm647 = vcmp.lt.f32.partialorder %v646, 0.0004427343
    %v648 = vsel %vm647, %v645, %v642
    %v649 = vadd.f32 %v555, 1.0
    %v650 = vlog2.pop %v649
    %v651 = vmul.f32 %v650, 0.6931472
    %v652 = vmul.f32 -0.5, %v555
    %v653 = vadd.f32 %v652, 1.0
    %v654 = vmul.f32 %v653, %v555
    %v655 = vand.u32 2147483647, %v555
    %vm656 = vcmp.lt.f32.partialorder %v655, 0.0004427343
    %v657 = vsel %vm656, %v654, %v651
    %v658 = vadd.f32 %v557, 1.0
    %v659 = vlog2.pop %v658
    %v660 = vmul.f32 %v659, 0.6931472
    %v661 = vmul.f32 -0.5, %v557
    %v662 = vadd.f32 %v661, 1.0
    %v663 = vmul.f32 %v662, %v557
    %v664 = vand.u32 2147483647, %v557
    %vm665 = vcmp.lt.f32.partialorder %v664, 0.0004427343
    %v666 = vsel %vm665, %v663, %v660
    %v667 = vadd.f32 %v559, 1.0
    %v668 = vlog2.pop %v667
    %v669 = vmul.f32 %v668, 0.6931472
    %v670 = vmul.f32 -0.5, %v559
    %v671 = vadd.f32 %v670, 1.0
    %v672 = vmul.f32 %v671, %v559
    %v673 = vand.u32 2147483647, %v559
    %vm674 = vcmp.lt.f32.partialorder %v673, 0.0004427343
    %v675 = vsel %vm674, %v672, %v669
    %v676 = vadd.f32 %v561, 1.0
    %v677 = vlog2.pop %v676
    %v678 = vmul.f32 %v677, 0.6931472
    %v679 = vmul.f32 -0.5, %v561
    %v680 = vadd.f32 %v679, 1.0
    %v681 = vmul.f32 %v680, %v561
    %v682 = vand.u32 2147483647, %v561
    %vm683 = vcmp.lt.f32.partialorder %v682, 0.0004427343
    %v684 = vsel %vm683, %v681, %v678
    %v685 = vadd.f32 %v563, 1.0
    %v686 = vlog2.pop %v685
    %v687 = vmul.f32 %v686, 0.6931472
    %v688 = vmul.f32 -0.5, %v563
    %v689 = vadd.f32 %v688, 1.0
    %v690 = vmul.f32 %v689, %v563
    %v691 = vand.u32 2147483647, %v563
    %vm692 = vcmp.lt.f32.partialorder %v691, 0.0004427343
    %v693 = vsel %vm692, %v690, %v687
    %v694 = vadd.f32 %v565, 1.0
    %v695 = vlog2.pop %v694
    %v696 = vmul.f32 %v695, 0.6931472
    %v697 = vmul.f32 -0.5, %v565
    %v698 = vadd.f32 %v697, 1.0
    %v699 = vmul.f32 %v698, %v565
    %v700 = vand.u32 2147483647, %v565
    %vm701 = vcmp.lt.f32.partialorder %v700, 0.0004427343
    %v702 = vsel %vm701, %v699, %v696
    %v703 = vadd.f32 %v567, 1.0
    %v704 = vlog2.pop %v703
    %v705 = vmul.f32 %v704, 0.6931472
    %v706 = vmul.f32 -0.5, %v567
    %v707 = vadd.f32 %v706, 1.0
    %v708 = vmul.f32 %v707, %v567
    %v709 = vand.u32 2147483647, %v567
    %vm710 = vcmp.lt.f32.partialorder %v709, 0.0004427343
    %v711 = vsel %vm710, %v708, %v705
    %v712 = vadd.f32 %v488, %v576
    %v713 = vadd.f32 %v489, %v585
    %v714 = vadd.f32 %v490, %v594
    %v715 = vadd.f32 %v491, %v603
    %v716 = vadd.f32 %v492, %v612
    %v717 = vadd.f32 %v493, %v621
    %v718 = vadd.f32 %v494, %v630
    %v719 = vadd.f32 %v495, %v639
    %v720 = vadd.f32 %v496, %v648
    %v721 = vadd.f32 %v497, %v657
    %v722 = vadd.f32 %v498, %v666
    %v723 = vadd.f32 %v499, %v675
    %v724 = vadd.f32 %v500, %v684
    %v725 = vadd.f32 %v501, %v693
    %v726 = vadd.f32 %v502, %v702
    %v727 = vadd.f32 %v503, %v711
    %v728 = vmul.f32 %v712, 0.01
    %v729 = vmul.f32 %v713, 0.01
    %v730 = vmul.f32 %v714, 0.01
    %v731 = vmul.f32 %v715, 0.01
    %v732 = vmul.f32 %v716, 0.01
    %v733 = vmul.f32 %v717, 0.01
    %v734 = vmul.f32 %v718, 0.01
    %v735 = vmul.f32 %v719, 0.01
    %v736 = vmul.f32 %v720, 0.01
    %v737 = vmul.f32 %v721, 0.01
    %v738 = vmul.f32 %v722, 0.01
    %v739 = vmul.f32 %v723, 0.01
    %v740 = vmul.f32 %v724, 0.01
    %v741 = vmul.f32 %v725, 0.01
    %v742 = vmul.f32 %v726, 0.01
    %v743 = vmul.f32 %v727, 0.01
    %v744 = vld [vmem:[%s5] sm:$0xf]
    %v745 = vld [vmem:[%s5 + $0x4] sm:$0xf]
    %v746 = vld [vmem:[%s5 + $0x8] sm:$0xf]
    %v747 = vld [vmem:[%s5 + $0xc] sm:$0xf]
    %v748 = vld [vmem:[%s5 + $0x10] sm:$0xf]
    %v749 = vld [vmem:[%s5 + $0x14] sm:$0xf]
    %v750 = vld [vmem:[%s5 + $0x18] sm:$0xf]
    %v751 = vld [vmem:[%s5 + $0x1c] sm:$0xf]
    %v752 = vpack.c.bf16 %v730, %v728
    %v753 = vpack.c.bf16 %v731, %v729
    %v754 = vpack.c.bf16 %v734, %v732
    %v755 = vpack.c.bf16 %v735, %v733
    %v756 = vpack.c.bf16 %v738, %v736
    %v757 = vpack.c.bf16 %v739, %v737
    %v758 = vpack.c.bf16 %v742, %v740
    %v759 = vpack.c.bf16 %v743, %v741
    %v760 = vld [vmem:[%s6] sm:$0xff]
    %v761 = vld [vmem:[%s6 + $0x8] sm:$0xff]
    %v762 = vld [vmem:[%s6 + $0x10] sm:$0xff]
    %v763 = vld [vmem:[%s6 + $0x18] sm:$0xff]
    %v764 = vld [vmem:[%s6 + $0x20] sm:$0xff]
    %v765 = vld [vmem:[%s6 + $0x28] sm:$0xff]
    %v766 = vld [vmem:[%s6 + $0x30] sm:$0xff]
    %v767 = vld [vmem:[%s6 + $0x38] sm:$0xff]
    %769 = vset.pattern.permute.xlu0 0
    %770 = vperm.xlu0 %769, %v760
    %v771 = vpop.permute.xlu0 %770
    %774 = vset.pattern.permute.xlu0 0
    %775 = vperm.xlu0 %774, %v761
    %v776 = vpop.permute.xlu0 %775
    %779 = vset.pattern.permute.xlu0 0
    %780 = vperm.xlu0 %779, %v762
    %v781 = vpop.permute.xlu0 %780
    %784 = vset.pattern.permute.xlu0 0
    %785 = vperm.xlu0 %784, %v763
    %v786 = vpop.permute.xlu0 %785
    %789 = vset.pattern.permute.xlu0 0
    %790 = vperm.xlu0 %789, %v764
    %v791 = vpop.permute.xlu0 %790
    %794 = vset.pattern.permute.xlu0 0
    %795 = vperm.xlu0 %794, %v765
    %v796 = vpop.permute.xlu0 %795
    %799 = vset.pattern.permute.xlu0 0
    %800 = vperm.xlu0 %799, %v766
    %v801 = vpop.permute.xlu0 %800
    %804 = vset.pattern.permute.xlu0 0
    %805 = vperm.xlu0 %804, %v767
    %v806 = vpop.permute.xlu0 %805
    %v816 = vunpack.c.l.b16 %v744
    %v817 = vunpack.c.l.b16 %v745
    %v818 = vunpack.c.l.b16 %v746
    %v819 = vunpack.c.l.b16 %v747
    %v820 = vunpack.c.l.b16 %v748
    %v821 = vunpack.c.l.b16 %v749
    %v822 = vunpack.c.l.b16 %v750
    %v823 = vunpack.c.l.b16 %v751
    %v824 = vpack.c.b16 %v817, %v816
    %v825 = vpack.c.b16 %v819, %v818
    %v826 = vpack.c.b16 %v821, %v820
    %v827 = vpack.c.b16 %v823, %v822
    %vm828 = vcmask 523264
    %v830 = vsel %vm828, %v824, 0
    %v833 = vsel %vm828, %v825, 0
    %v836 = vsel %vm828, %v826, 0
    %v839 = vsel %vm828, %v827, 0
    %841 = vmatprep.subr.bf16.mxu0 0
    %842 = vmatpush1.bf16.msra.mxu0 0
    %843 = vmatprep.subr.bf16.mxu0 0
    %844 = vmatpush1.bf16.msra.mxu0 0
    %845 = vmatprep.subr.bf16.mxu0 0
    %846 = vmatpush1.bf16.msra.mxu0 0
    %847 = vmatprep.subr.bf16.mxu0 0
    %848 = vmatpush1.bf16.msra.mxu0 0
    %849 = vmatprep.subr.bf16.mxu0 %v759
    %850 = vmatpush1.bf16.msra.mxu0 %v758
    %851 = vmatprep.subr.bf16.mxu0 %v757
    %852 = vmatpush1.bf16.msra.mxu0 %v756
    %853 = vmatprep.subr.bf16.mxu0 %v755
    %854 = vmatpush1.bf16.msra.mxu0 %v754
    %855 = vmatprep.subr.bf16.mxu0 %v753
    %856 = vmatpush1.bf16.msra.mxu0 %v752
    %857 = vmatprep.subr.bf16.mxu0 0
    %858 = vmatpush2.bf16.msra.mxu0 0
    %859 = vmatprep.subr.bf16.mxu0 0
    %860 = vmatpush2.bf16.msra.mxu0 0
    %861 = vmatprep.subr.bf16.mxu0 0
    %862 = vmatpush2.bf16.msra.mxu0 0
    %863 = vmatprep.subr.bf16.mxu0 0
    %864 = vmatpush2.bf16.msra.mxu0 0
    %865 = vmatprep.subr.bf16.mxu0 0
    %866 = vmatpush2.bf16.msra.mxu0 0
    %867 = vmatprep.subr.bf16.mxu0 0
    %868 = vmatpush2.bf16.msra.mxu0 0
    %869 = vmatprep.subr.bf16.mxu0 0
    %870 = vmatpush2.bf16.msra.mxu0 0
    %871 = vmatprep.subr.bf16.mxu0 0
    %872 = vmatpush2.bf16.msra.mxu0 0
    %873 = vmatprep.mubr.bf16.mxu0 0
    %874 = vmatmul.mubr.bf16.gmra.mxu0 %v830
    %v875 = vpop.f32.mrf.mxu0
    %v876 = vadd.f32 %v771, %v875
    %v877 = vpop.f32.mrf.mxu0
    %v878 = vadd.f32 %v771, %v877
    %v879 = vpop.f32.mrf.mxu0
    %v880 = vadd.f32 %v776, %v879
    %v881 = vpop.f32.mrf.mxu0
    %v882 = vadd.f32 %v776, %v881
    %883 = vmatprep.mubr.bf16.mxu0 0
    %884 = vmatmul.mubr.bf16.gmra.mxu0 %v833
    %v885 = vpop.f32.mrf.mxu0
    %v886 = vadd.f32 %v781, %v885
    %v887 = vpop.f32.mrf.mxu0
    %v888 = vadd.f32 %v781, %v887
    %v889 = vpop.f32.mrf.mxu0
    %v890 = vadd.f32 %v786, %v889
    %v891 = vpop.f32.mrf.mxu0
    %v892 = vadd.f32 %v786, %v891
    %893 = vmatprep.mubr.bf16.mxu0 0
    %894 = vmatmul.mubr.bf16.gmra.mxu0 %v836
    %v895 = vpop.f32.mrf.mxu0
    %v896 = vadd.f32 %v791, %v895
    %v897 = vpop.f32.mrf.mxu0
    %v898 = vadd.f32 %v791, %v897
    %v899 = vpop.f32.mrf.mxu0
    %v900 = vadd.f32 %v796, %v899
    %v901 = vpop.f32.mrf.mxu0
    %v902 = vadd.f32 %v796, %v901
    %903 = vmatprep.mubr.bf16.mxu0 0
    %904 = vmatmul.mubr.bf16.gmra.mxu0 %v839
    %v905 = vpop.f32.mrf.mxu0
    %v906 = vadd.f32 %v801, %v905
    %v907 = vpop.f32.mrf.mxu0
    %v908 = vadd.f32 %v801, %v907
    %v909 = vpop.f32.mrf.mxu0
    %v910 = vadd.f32 %v806, %v909
    %v911 = vpop.f32.mrf.mxu0
    %v912 = vadd.f32 %v806, %v911
    %913 = vdwg.mxu0
    %v914 = vmul.f32 %v876, 100.0
    %v915 = vmul.f32 %v878, 100.0
    %v916 = vmul.f32 %v880, 100.0
    %v917 = vmul.f32 %v882, 100.0
    %v918 = vmul.f32 %v886, 100.0
    %v919 = vmul.f32 %v888, 100.0
    %v920 = vmul.f32 %v890, 100.0
    %v921 = vmul.f32 %v892, 100.0
    %v922 = vmul.f32 %v896, 100.0
    %v923 = vmul.f32 %v898, 100.0
    %v924 = vmul.f32 %v900, 100.0
    %v925 = vmul.f32 %v902, 100.0
    %v926 = vmul.f32 %v906, 100.0
    %v927 = vmul.f32 %v908, 100.0
    %v928 = vmul.f32 %v910, 100.0
    %v929 = vmul.f32 %v912, 100.0
    %v930 = vmax.f32 %v914, 0.0
    %v931 = vmax.f32 %v915, 0.0
    %v932 = vmax.f32 %v916, 0.0
    %v933 = vmax.f32 %v917, 0.0
    %v934 = vmax.f32 %v918, 0.0
    %v935 = vmax.f32 %v919, 0.0
    %v936 = vmax.f32 %v920, 0.0
    %v937 = vmax.f32 %v921, 0.0
    %v938 = vmax.f32 %v922, 0.0
    %v939 = vmax.f32 %v923, 0.0
    %v940 = vmax.f32 %v924, 0.0
    %v941 = vmax.f32 %v925, 0.0
    %v942 = vmax.f32 %v926, 0.0
    %v943 = vmax.f32 %v927, 0.0
    %v944 = vmax.f32 %v928, 0.0
    %v945 = vmax.f32 %v929, 0.0
    %v946 = vand.u32 2147483647, %v914
    %v947 = vand.u32 2147483647, %v915
    %v948 = vand.u32 2147483647, %v916
    %v949 = vand.u32 2147483647, %v917
    %v950 = vand.u32 2147483647, %v918
    %v951 = vand.u32 2147483647, %v919
    %v952 = vand.u32 2147483647, %v920
    %v953 = vand.u32 2147483647, %v921
    %v954 = vand.u32 2147483647, %v922
    %v955 = vand.u32 2147483647, %v923
    %v956 = vand.u32 2147483647, %v924
    %v957 = vand.u32 2147483647, %v925
    %v958 = vand.u32 2147483647, %v926
    %v959 = vand.u32 2147483647, %v927
    %v960 = vand.u32 2147483647, %v928
    %v961 = vand.u32 2147483647, %v929
    %v962 = vsub.f32 0.0, %v946
    %v963 = vsub.f32 0.0, %v947
    %v964 = vsub.f32 0.0, %v948
    %v965 = vsub.f32 0.0, %v949
    %v966 = vsub.f32 0.0, %v950
    %v967 = vsub.f32 0.0, %v951
    %v968 = vsub.f32 0.0, %v952
    %v969 = vsub.f32 0.0, %v953
    %v970 = vsub.f32 0.0, %v954
    %v971 = vsub.f32 0.0, %v955
    %v972 = vsub.f32 0.0, %v956
    %v973 = vsub.f32 0.0, %v957
    %v974 = vsub.f32 0.0, %v958
    %v975 = vsub.f32 0.0, %v959
    %v976 = vsub.f32 0.0, %v960
    %v977 = vsub.f32 0.0, %v961
    %v978 = vmul.f32 %v962, 1.442695
    %v979 = vpow.pop %v978
    %v980 = vmul.f32 %v963, 1.442695
    %v981 = vpow.pop %v980
    %v982 = vmul.f32 %v964, 1.442695
    %v983 = vpow.pop %v982
    %v984 = vmul.f32 %v965, 1.442695
    %v985 = vpow.pop %v984
    %v986 = vmul.f32 %v966, 1.442695
    %v987 = vpow.pop %v986
    %v988 = vmul.f32 %v967, 1.442695
    %v989 = vpow.pop %v988
    %v990 = vmul.f32 %v968, 1.442695
    %v991 = vpow.pop %v990
    %v992 = vmul.f32 %v969, 1.442695
    %v993 = vpow.pop %v992
    %v994 = vmul.f32 %v970, 1.442695
    %v995 = vpow.pop %v994
    %v996 = vmul.f32 %v971, 1.442695
    %v997 = vpow.pop %v996
    %v998 = vmul.f32 %v972, 1.442695
    %v999 = vpow.pop %v998
    %v1000 = vmul.f32 %v973, 1.442695
    %v1001 = vpow.pop %v1000
    %v1002 = vmul.f32 %v974, 1.442695
    %v1003 = vpow.pop %v1002
    %v1004 = vmul.f32 %v975, 1.442695
    %v1005 = vpow.pop %v1004
    %v1006 = vmul.f32 %v976, 1.442695
    %v1007 = vpow.pop %v1006
    %v1008 = vmul.f32 %v977, 1.442695
    %v1009 = vpow.pop %v1008
    %v1010 = vadd.f32 %v979, 1.0
    %v1011 = vlog2.pop %v1010
    %v1012 = vmul.f32 %v1011, 0.6931472
    %v1013 = vmul.f32 -0.5, %v979
    %v1014 = vadd.f32 %v1013, 1.0
    %v1015 = vmul.f32 %v1014, %v979
    %v1016 = vand.u32 2147483647, %v979
    %vm1017 = vcmp.lt.f32.partialorder %v1016, 0.0004427343
    %v1018 = vsel %vm1017, %v1015, %v1012
    %v1019 = vadd.f32 %v981, 1.0
    %v1020 = vlog2.pop %v1019
    %v1021 = vmul.f32 %v1020, 0.6931472
    %v1022 = vmul.f32 -0.5, %v981
    %v1023 = vadd.f32 %v1022, 1.0
    %v1024 = vmul.f32 %v1023, %v981
    %v1025 = vand.u32 2147483647, %v981
    %vm1026 = vcmp.lt.f32.partialorder %v1025, 0.0004427343
    %v1027 = vsel %vm1026, %v1024, %v1021
    %v1028 = vadd.f32 %v983, 1.0
    %v1029 = vlog2.pop %v1028
    %v1030 = vmul.f32 %v1029, 0.6931472
    %v1031 = vmul.f32 -0.5, %v983
    %v1032 = vadd.f32 %v1031, 1.0
    %v1033 = vmul.f32 %v1032, %v983
    %v1034 = vand.u32 2147483647, %v983
    %vm1035 = vcmp.lt.f32.partialorder %v1034, 0.0004427343
    %v1036 = vsel %vm1035, %v1033, %v1030
    %v1037 = vadd.f32 %v985, 1.0
    %v1038 = vlog2.pop %v1037
    %v1039 = vmul.f32 %v1038, 0.6931472
    %v1040 = vmul.f32 -0.5, %v985
    %v1041 = vadd.f32 %v1040, 1.0
    %v1042 = vmul.f32 %v1041, %v985
    %v1043 = vand.u32 2147483647, %v985
    %vm1044 = vcmp.lt.f32.partialorder %v1043, 0.0004427343
    %v1045 = vsel %vm1044, %v1042, %v1039
    %v1046 = vadd.f32 %v987, 1.0
    %v1047 = vlog2.pop %v1046
    %v1048 = vmul.f32 %v1047, 0.6931472
    %v1049 = vmul.f32 -0.5, %v987
    %v1050 = vadd.f32 %v1049, 1.0
    %v1051 = vmul.f32 %v1050, %v987
    %v1052 = vand.u32 2147483647, %v987
    %vm1053 = vcmp.lt.f32.partialorder %v1052, 0.0004427343
    %v1054 = vsel %vm1053, %v1051, %v1048
    %v1055 = vadd.f32 %v989, 1.0
    %v1056 = vlog2.pop %v1055
    %v1057 = vmul.f32 %v1056, 0.6931472
    %v1058 = vmul.f32 -0.5, %v989
    %v1059 = vadd.f32 %v1058, 1.0
    %v1060 = vmul.f32 %v1059, %v989
    %v1061 = vand.u32 2147483647, %v989
    %vm1062 = vcmp.lt.f32.partialorder %v1061, 0.0004427343
    %v1063 = vsel %vm1062, %v1060, %v1057
    %v1064 = vadd.f32 %v991, 1.0
    %v1065 = vlog2.pop %v1064
    %v1066 = vmul.f32 %v1065, 0.6931472
    %v1067 = vmul.f32 -0.5, %v991
    %v1068 = vadd.f32 %v1067, 1.0
    %v1069 = vmul.f32 %v1068, %v991
    %v1070 = vand.u32 2147483647, %v991
    %vm1071 = vcmp.lt.f32.partialorder %v1070, 0.0004427343
    %v1072 = vsel %vm1071, %v1069, %v1066
    %v1073 = vadd.f32 %v993, 1.0
    %v1074 = vlog2.pop %v1073
    %v1075 = vmul.f32 %v1074, 0.6931472
    %v1076 = vmul.f32 -0.5, %v993
    %v1077 = vadd.f32 %v1076, 1.0
    %v1078 = vmul.f32 %v1077, %v993
    %v1079 = vand.u32 2147483647, %v993
    %vm1080 = vcmp.lt.f32.partialorder %v1079, 0.0004427343
    %v1081 = vsel %vm1080, %v1078, %v1075
    %v1082 = vadd.f32 %v995, 1.0
    %v1083 = vlog2.pop %v1082
    %v1084 = vmul.f32 %v1083, 0.6931472
    %v1085 = vmul.f32 -0.5, %v995
    %v1086 = vadd.f32 %v1085, 1.0
    %v1087 = vmul.f32 %v1086, %v995
    %v1088 = vand.u32 2147483647, %v995
    %vm1089 = vcmp.lt.f32.partialorder %v1088, 0.0004427343
    %v1090 = vsel %vm1089, %v1087, %v1084
    %v1091 = vadd.f32 %v997, 1.0
    %v1092 = vlog2.pop %v1091
    %v1093 = vmul.f32 %v1092, 0.6931472
    %v1094 = vmul.f32 -0.5, %v997
    %v1095 = vadd.f32 %v1094, 1.0
    %v1096 = vmul.f32 %v1095, %v997
    %v1097 = vand.u32 2147483647, %v997
    %vm1098 = vcmp.lt.f32.partialorder %v1097, 0.0004427343
    %v1099 = vsel %vm1098, %v1096, %v1093
    %v1100 = vadd.f32 %v999, 1.0
    %v1101 = vlog2.pop %v1100
    %v1102 = vmul.f32 %v1101, 0.6931472
    %v1103 = vmul.f32 -0.5, %v999
    %v1104 = vadd.f32 %v1103, 1.0
    %v1105 = vmul.f32 %v1104, %v999
    %v1106 = vand.u32 2147483647, %v999
    %vm1107 = vcmp.lt.f32.partialorder %v1106, 0.0004427343
    %v1108 = vsel %vm1107, %v1105, %v1102
    %v1109 = vadd.f32 %v1001, 1.0
    %v1110 = vlog2.pop %v1109
    %v1111 = vmul.f32 %v1110, 0.6931472
    %v1112 = vmul.f32 -0.5, %v1001
    %v1113 = vadd.f32 %v1112, 1.0
    %v1114 = vmul.f32 %v1113, %v1001
    %v1115 = vand.u32 2147483647, %v1001
    %vm1116 = vcmp.lt.f32.partialorder %v1115, 0.0004427343
    %v1117 = vsel %vm1116, %v1114, %v1111
    %v1118 = vadd.f32 %v1003, 1.0
    %v1119 = vlog2.pop %v1118
    %v1120 = vmul.f32 %v1119, 0.6931472
    %v1121 = vmul.f32 -0.5, %v1003
    %v1122 = vadd.f32 %v1121, 1.0
    %v1123 = vmul.f32 %v1122, %v1003
    %v1124 = vand.u32 2147483647, %v1003
    %vm1125 = vcmp.lt.f32.partialorder %v1124, 0.0004427343
    %v1126 = vsel %vm1125, %v1123, %v1120
    %v1127 = vadd.f32 %v1005, 1.0
    %v1128 = vlog2.pop %v1127
    %v1129 = vmul.f32 %v1128, 0.6931472
    %v1130 = vmul.f32 -0.5, %v1005
    %v1131 = vadd.f32 %v1130, 1.0
    %v1132 = vmul.f32 %v1131, %v1005
    %v1133 = vand.u32 2147483647, %v1005
    %vm1134 = vcmp.lt.f32.partialorder %v1133, 0.0004427343
    %v1135 = vsel %vm1134, %v1132, %v1129
    %v1136 = vadd.f32 %v1007, 1.0
    %v1137 = vlog2.pop %v1136
    %v1138 = vmul.f32 %v1137, 0.6931472
    %v1139 = vmul.f32 -0.5, %v1007
    %v1140 = vadd.f32 %v1139, 1.0
    %v1141 = vmul.f32 %v1140, %v1007
    %v1142 = vand.u32 2147483647, %v1007
    %vm1143 = vcmp.lt.f32.partialorder %v1142, 0.0004427343
    %v1144 = vsel %vm1143, %v1141, %v1138
    %v1145 = vadd.f32 %v1009, 1.0
    %v1146 = vlog2.pop %v1145
    %v1147 = vmul.f32 %v1146, 0.6931472
    %v1148 = vmul.f32 -0.5, %v1009
    %v1149 = vadd.f32 %v1148, 1.0
    %v1150 = vmul.f32 %v1149, %v1009
    %v1151 = vand.u32 2147483647, %v1009
    %vm1152 = vcmp.lt.f32.partialorder %v1151, 0.0004427343
    %v1153 = vsel %vm1152, %v1150, %v1147
    %v1154 = vadd.f32 %v930, %v1018
    %v1155 = vadd.f32 %v931, %v1027
    %v1156 = vadd.f32 %v932, %v1036
    %v1157 = vadd.f32 %v933, %v1045
    %v1158 = vadd.f32 %v934, %v1054
    %v1159 = vadd.f32 %v935, %v1063
    %v1160 = vadd.f32 %v936, %v1072
    %v1161 = vadd.f32 %v937, %v1081
    %v1162 = vadd.f32 %v938, %v1090
    %v1163 = vadd.f32 %v939, %v1099
    %v1164 = vadd.f32 %v940, %v1108
    %v1165 = vadd.f32 %v941, %v1117
    %v1166 = vadd.f32 %v942, %v1126
    %v1167 = vadd.f32 %v943, %v1135
    %v1168 = vadd.f32 %v944, %v1144
    %v1169 = vadd.f32 %v945, %v1153
    %v1170 = vmul.f32 %v1154, 0.01
    %v1171 = vmul.f32 %v1155, 0.01
    %v1172 = vmul.f32 %v1156, 0.01
    %v1173 = vmul.f32 %v1157, 0.01
    %v1174 = vmul.f32 %v1158, 0.01
    %v1175 = vmul.f32 %v1159, 0.01
    %v1176 = vmul.f32 %v1160, 0.01
    %v1177 = vmul.f32 %v1161, 0.01
    %v1178 = vmul.f32 %v1162, 0.01
    %v1179 = vmul.f32 %v1163, 0.01
    %v1180 = vmul.f32 %v1164, 0.01
    %v1181 = vmul.f32 %v1165, 0.01
    %v1182 = vmul.f32 %v1166, 0.01
    %v1183 = vmul.f32 %v1167, 0.01
    %v1184 = vmul.f32 %v1168, 0.01
    %v1185 = vmul.f32 %v1169, 0.01
    %v1186 = vld [vmem:[%s7] sm:$0xf]
    %v1187 = vld [vmem:[%s7 + $0x4] sm:$0x7]
    %v1188 = vpack.c.bf16 %v1172, %v1170
    %v1189 = vpack.c.bf16 %v1173, %v1171
    %v1190 = vpack.c.bf16 %v1176, %v1174
    %v1191 = vpack.c.bf16 %v1177, %v1175
    %v1192 = vpack.c.bf16 %v1180, %v1178
    %v1193 = vpack.c.bf16 %v1181, %v1179
    %v1194 = vpack.c.bf16 %v1184, %v1182
    %v1195 = vpack.c.bf16 %v1185, %v1183
    %v1196 = vld [vmem:[%s8] sm:$0xff]
    %v1197 = vld [vmem:[%s8 + $0x8] sm:$0x1f]
    %1199 = vset.pattern.permute.xlu0 0
    %1200 = vperm.xlu0 %1199, %v1196
    %v1201 = vpop.permute.xlu0 %1200
    %1204 = vset.pattern.permute.xlu0 0
    %1205 = vperm.xlu0 %1204, %v1197
    %v1206 = vpop.permute.xlu0 %1205
    %v1210 = vunpack.c.l.b16 %v1186
    %v1211 = vunpack.c.l.b16 %v1187
    %v1212 = vpack.c.b16 %v1211, %v1210
    %v1214 = vsel %vm828, %v1212, 0
    %1216 = vmatprep.subr.bf16.mxu0 0
    %1217 = vmatpush1.bf16.msra.mxu0 0
    %1218 = vmatprep.subr.bf16.mxu0 0
    %1219 = vmatpush1.bf16.msra.mxu0 0
    %1220 = vmatprep.subr.bf16.mxu0 0
    %1221 = vmatpush1.bf16.msra.mxu0 0
    %1222 = vmatprep.subr.bf16.mxu0 0
    %1223 = vmatpush1.bf16.msra.mxu0 0
    %1224 = vmatprep.subr.bf16.mxu0 %v1195
    %1225 = vmatpush1.bf16.msra.mxu0 %v1194
    %1226 = vmatprep.subr.bf16.mxu0 %v1193
    %1227 = vmatpush1.bf16.msra.mxu0 %v1192
    %1228 = vmatprep.subr.bf16.mxu0 %v1191
    %1229 = vmatpush1.bf16.msra.mxu0 %v1190
    %1230 = vmatprep.subr.bf16.mxu0 %v1189
    %1231 = vmatpush1.bf16.msra.mxu0 %v1188
    %1232 = vmatprep.subr.bf16.mxu0 0
    %1233 = vmatpush2.bf16.msra.mxu0 0
    %1234 = vmatprep.subr.bf16.mxu0 0
    %1235 = vmatpush2.bf16.msra.mxu0 0
    %1236 = vmatprep.subr.bf16.mxu0 0
    %1237 = vmatpush2.bf16.msra.mxu0 0
    %1238 = vmatprep.subr.bf16.mxu0 0
    %1239 = vmatpush2.bf16.msra.mxu0 0
    %1240 = vmatprep.subr.bf16.mxu0 0
    %1241 = vmatpush2.bf16.msra.mxu0 0
    %1242 = vmatprep.subr.bf16.mxu0 0
    %1243 = vmatpush2.bf16.msra.mxu0 0
    %1244 = vmatprep.subr.bf16.mxu0 0
    %1245 = vmatpush2.bf16.msra.mxu0 0
    %1246 = vmatprep.subr.bf16.mxu0 0
    %1247 = vmatpush2.bf16.msra.mxu0 0
    %1248 = vmatprep.mubr.bf16.mxu0 0
    %1249 = vmatmul.mubr.bf16.gmra.mxu0 %v1214
    %v1250 = vpop.f32.mrf.mxu0
    %v1251 = vadd.f32 %v1201, %v1250
    %v1252 = vpop.f32.mrf.mxu0
    %v1253 = vadd.f32 %v1201, %v1252
    %v1254 = vpop.f32.mrf.mxu0
    %v1255 = vadd.f32 %v1206, %v1254
    %v1256 = vpop.f32.mrf.mxu0
    %v1257 = vadd.f32 %v1206, %v1256
    %1258 = vdwg.mxu0
    %1259 = vst [vmem:[#allocation2] sm:$0xff] %v1251
    %1260 = vst [vmem:[#allocation2 + $0x8] sm:$0xff] %v1253
    %1261 = vst [vmem:[#allocation2 + $0x10] sm:$0x1f] %v1255
    %1262 = vst [vmem:[#allocation2 + $0x18] sm:$0x1f] %v1257
    // Predicated region
    $region38: #{tpu_custom_call.1} parent=1 // pred_check
      _
    $region39: #{tpu_custom_call.1} parent=1 // pred_check_branch
      %1264 = sbr.rel (0) target = $region41
    $region40: #{tpu_custom_call.1} parent=1 // pred_region
      %s1266 = ssub.s32 512, 512
      %1267 = vsyncadd [#allocation3], %s1266
      %s1268 = sshll.u32 [#allocation2], 4
      %s1269 = int_to_ptr.vmem [resolvable:$true] %s1268
      %1274 = dma.vmem_to_hbm [thread:$0]  %s1269, 512, %s9, [#allocation3], 256, 256, 16
    $region41: #{tpu_custom_call.1} parent=1 // pred_fallthru
      _
    // Predicated region
    $region42: #{tpu_custom_call.1} parent=1 // pred_check
      _
    $region43: #{tpu_custom_call.1} parent=1 // pred_check_branch
      %1276 = sbr.rel (0) target = $region45
    $region44: #{tpu_custom_call.1} parent=1 // pred_region
      %1277 = dma.done [#allocation3], 512
    $region45: #{tpu_custom_call.1} parent=1 // pred_fallthru
      _
    %1278 = vsyncpa [#allocation3], 1

</llo_original>
